<compile_context>
chip_gen: v7x
topology: tpu7x:2x2x1
jax: 0.10.0
libtpu: 0.0.40
codegen_flags: <defaults>
</compile_context>

<pallas_src>
from functools import partial

import jax
import jax.numpy as jnp
import numpy as np
from jax.experimental import pallas as pl
from jax.experimental.pallas import tpu as pltpu

# GridWorld: agent observation shape = (2,), state = concat(agent, target) -> 4
NUM_INPUTS = 4      # np.prod((2,)) * 2
NUM_HIDDEN = 128
NUM_OUTPUTS = 4     # GridWorld action space (up/down/left/right)
I_PAD = 8           # feature axis zero-padded to a full f32 sublane group


def _tpu_supports_bf16_eup():
    """bf16 transcendental path exists on v6e (Trillium) and later; not on v5e/v5p."""
    try:
        kind = jax.devices()[0].device_kind.lower()
    except Exception:
        return False
    return any(tag in kind for tag in ("v6", "v7", "tpu7", "trillium"))


# Static (trace-time) choice of activation dtype: bf16 halves the EUP work on
# v6e/v7x; v5e has no bf16 VPU/EUP, so keep f32 there.
_ACT_DTYPE = jnp.bfloat16 if _tpu_supports_bf16_eup() else jnp.float32


def mlp_kernel(xT_ref, w1h_ref, w2_ref, oT_ref):
    """Fused MLP forward on one batch tile (batch on the 128-wide lane axis).

    xT_ref : (I_PAD, TB)            bf16 inputs, features on sublanes (zero-padded rows 4..7)
    w1h_ref: (NUM_HIDDEN, I_PAD)    bf16 0.5 * lin1.weight (K zero-padded), VMEM-resident
    w2_ref : (NUM_OUTPUTS, NUM_HIDDEN) bf16 lin2.weight, VMEM-resident
    oT_ref : (NUM_OUTPUTS, TB)      f32 softmax probabilities, classes on sublanes
    """
    # lin1 (half-scaled) : (H, I) @ (I, TB) -> (H, TB), f32 accumulate on the MXU.
    pre_half = jnp.dot(w1h_ref[...], xT_ref[...],
                       preferred_element_type=jnp.float32)

    # sigmoid via a single EUP op: sigmoid(z) = 0.5*tanh(z/2) + 0.5
    # (the 1/2 inside tanh is already folded into w1h).
    t = jnp.tanh(pre_half.astype(_ACT_DTYPE))
    h = (t * 0.5 + 0.5).astype(jnp.bfloat16)          # (H, TB) second-matmul operand

    # lin2 : (O, H) @ (H, TB) -> (O, TB), f32 accumulate.
    logits = jnp.dot(w2_ref[...], h, preferred_element_type=jnp.float32)

    # Numerically stable softmax over the class axis (NUM_OUTPUTS sublane rows).
    # Unrolled max/sum over 4 rows -> plain VPU ops, no cross-lane reduce.
    m = logits[0:1, :]
    for i in range(1, NUM_OUTPUTS):
        m = jnp.maximum(m, logits[i:i + 1, :])
    e = jnp.exp(logits - m)                            # (O, TB), tiny EUP cost
    denom = e[0:1, :]
    for i in range(1, NUM_OUTPUTS):
        denom = denom + e[i:i + 1, :]
    # Exact normalization (not approx reciprocal): rows sum to 1 up to f32 rounding.
    oT_ref[...] = e / denom


def _round_up(n, m):
    return ((n + m - 1) // m) * m


def _choose_tile(batch, tb):
    """Pick the batch tile: as large as `tb`, but always >= 2 grid steps when the
    batch allows it so the parallel axis can split across both TensorCores (v7x)."""
    assert tb >= 128 and tb % 128 == 0, "batch tile must be a multiple of 128 lanes"
    b128 = _round_up(batch, 128)
    if b128 <= 128:
        return 128
    half = _round_up(-(-b128 // 2), 128)   # ceil(b128/2) rounded to 128
    return max(128, min(tb, half))


def prepare_weights(w1, w2):
    """Fold the tanh-sigmoid 1/2 into lin1.weight, zero-pad K 4->8, cast to bf16.

    w1: (NUM_HIDDEN, NUM_INPUTS)  PyTorch lin1.weight layout
    w2: (NUM_OUTPUTS, NUM_HIDDEN) PyTorch lin2.weight layout
    """
    w1h = jnp.pad(jnp.asarray(w1, jnp.float32) * 0.5,
                  ((0, 0), (0, I_PAD - NUM_INPUTS))).astype(jnp.bfloat16)
    w2b = jnp.asarray(w2, jnp.float32).astype(jnp.bfloat16)
    return w1h, w2b


@partial(jax.jit, static_argnames=("tb",))
def mlp_forward_transposed(xT, w1h, w2b, *, tb=4096):
    """Lane-dense end-to-end path (no wrapper transposes).

    xT : (NUM_INPUTS or I_PAD, B)  inputs with batch on the lane axis
    w1h, w2b : outputs of prepare_weights()
    Returns (NUM_OUTPUTS, B) float32 softmax probabilities (classes on sublanes).
    """
    xT = jnp.asarray(xT, jnp.bfloat16)
    n_feat, batch = xT.shape
    tb_eff = _choose_tile(batch, tb)
    bp = _round_up(batch, tb_eff)
    # Padded batch columns just compute a uniform softmax and are sliced off below.
    xTp = jnp.pad(xT, ((0, I_PAD - n_feat), (0, bp - batch)))

    outT = pl.pallas_call(
        mlp_kernel,
        out_shape=jax.ShapeDtypeStruct((NUM_OUTPUTS, bp), jnp.float32),
        grid=(bp // tb_eff,),
        in_specs=[
            pl.BlockSpec((I_PAD, tb_eff), lambda i: (0, i)),              # x tile
            pl.BlockSpec((NUM_HIDDEN, I_PAD), lambda i: (0, 0)),          # w1 resident
            pl.BlockSpec((NUM_OUTPUTS, NUM_HIDDEN), lambda i: (0, 0)),    # w2 resident
        ],
        out_specs=pl.BlockSpec((NUM_OUTPUTS, tb_eff), lambda i: (0, i)),
        compiler_params=pltpu.CompilerParams(
            dimension_semantics=("parallel",),
        ),
    )(xTp, w1h, w2b)

    return outT[:, :batch]


@partial(jax.jit, static_argnames=("tb",))
def mlp_forward(x, w1, w2, *, tb=4096):
    """Forward pass matching the torch module: returns (B, NUM_OUTPUTS) softmax probs.

    x  : any shape reshapeable to (-1, NUM_INPUTS)
    w1 : (NUM_HIDDEN, NUM_INPUTS)   -- PyTorch lin1.weight layout
    w2 : (NUM_OUTPUTS, NUM_HIDDEN)  -- PyTorch lin2.weight layout

    The reshape/transpose/pad/cast layout ops fuse with the pallas_call under
    this single jit (one dispatch). Use `mlp_forward_transposed` directly if the
    producer/consumer can stay in the lane-dense (I, B) / (O, B) layout.
    """
    x2 = jnp.asarray(x, jnp.float32).reshape(-1, NUM_INPUTS)
    w1h, w2b = prepare_weights(w1, w2)
    outT = mlp_forward_transposed(x2.T, w1h, w2b, tb=tb)
    return outT.T


def init_params(key):
    """Deterministic init matching torch.nn.Linear default:
    U(-1/sqrt(fan_in), 1/sqrt(fan_in)), weight shape (out, in)."""
    k1, k2 = jax.random.split(key)
    b1 = 1.0 / np.sqrt(NUM_INPUTS)
    b2 = 1.0 / np.sqrt(NUM_HIDDEN)
    w1 = jax.random.uniform(k1, (NUM_HIDDEN, NUM_INPUTS), jnp.float32, -b1, b1)
    w2 = jax.random.uniform(k2, (NUM_OUTPUTS, NUM_HIDDEN), jnp.float32, -b2, b2)
    return w1, w2


def reference_forward(x, w1, w2):
    x2 = jnp.asarray(x, jnp.float32).reshape(-1, NUM_INPUTS)
    h = jax.nn.sigmoid(x2 @ jnp.asarray(w1, jnp.float32).T)
    return jax.nn.softmax(h @ jnp.asarray(w2, jnp.float32).T, axis=1)


if __name__ == "__main__":
    key = jax.random.PRNGKey(0)
    kx1, kx2, kp = jax.random.split(key, 3)
    w1, w2 = init_params(kp)

    # Small batch of 8 gridworld states (single 128-lane tile).
    x_small = jax.random.uniform(kx1, (8, NUM_INPUTS), jnp.float32, 0.0, 5.0)
    y_small = mlp_forward(x_small, w1, w2)
    jax.block_until_ready(y_small)
    np.testing.assert_allclose(np.asarray(y_small),
                               np.asarray(reference_forward(x_small, w1, w2)),
                               rtol=5e-3, atol=5e-3)
    np.testing.assert_allclose(np.asarray(y_small).sum(axis=1),
                               np.ones(x_small.shape[0]), rtol=5e-3, atol=5e-3)

    # Ragged batch exercising a multi-step pipelined grid (>= 2 steps -> both TCs on v7x).
    x_big = jax.random.uniform(kx2, (1000, NUM_INPUTS), jnp.float32, 0.0, 5.0)
    y_big = mlp_forward(x_big, w1, w2)
    jax.block_until_ready(y_big)
    np.testing.assert_allclose(np.asarray(y_big),
                               np.asarray(reference_forward(x_big, w1, w2)),
                               rtol=5e-3, atol=5e-3)
    np.testing.assert_allclose(np.asarray(y_big).sum(axis=1),
                               np.ones(x_big.shape[0]), rtol=5e-3, atol=5e-3)

    # Lane-dense end-to-end entry point (no wrapper transposes at all).
    w1h, w2b = prepare_weights(w1, w2)
    yT = mlp_forward_transposed(jnp.asarray(x_big, jnp.float32).T, w1h, w2b)
    jax.block_until_ready(yT)
    np.testing.assert_allclose(np.asarray(yT.T), np.asarray(y_big), rtol=5e-3, atol=5e-3)

    assert y_small.shape == (8, NUM_OUTPUTS) and y_big.shape == (1000, NUM_OUTPUTS)
    print("KERNEL_OK")
</pallas_src>

<mosaic_0001>
module attributes {stable_mosaic.version = 11 : i64} {
  func.func @mlp_kernel(%arg0: i32, %arg1: memref<8x128xbf16, #tpu.memory_space<vmem>>, %arg2: memref<128x8xbf16, #tpu.memory_space<vmem>>, %arg3: memref<4x128xbf16, #tpu.memory_space<vmem>>, %arg4: memref<4x128xf32, #tpu.memory_space<vmem>>) attributes {dimension_semantics = [#tpu.dimension_semantics<parallel>], iteration_bounds = array<i64: 1>, scalar_prefetch = 0 : i64, scratch_operands = 0 : i64, tpu.core_type = #tpu.core_type<tc>, window_params = [{transform_indices = @transform_0, window_bounds = array<i64: 8, 128>}, {pipeline_mode = #tpu.pipeline_mode<synchronous>, transform_indices = @transform_1, window_bounds = array<i64: 128, 8>}, {pipeline_mode = #tpu.pipeline_mode<synchronous>, transform_indices = @transform_2, window_bounds = array<i64: 4, 128>}, {transform_indices = @transform_3, window_bounds = array<i64: 4, 128>}]} {
    %c0 = arith.constant 0 : index
    %c0_0 = arith.constant 0 : index
    %0 = vector.load %arg2[%c0, %c0_0] : memref<128x8xbf16, #tpu.memory_space<vmem>>, vector<128x8xbf16>
    %c0_1 = arith.constant 0 : index
    %c0_2 = arith.constant 0 : index
    %1 = vector.load %arg1[%c0_1, %c0_2] : memref<8x128xbf16, #tpu.memory_space<vmem>>, vector<8x128xbf16>
    %cst = arith.constant dense<0.000000e+00> : vector<128x128xf32>
    %2 = tpu.matmul %0, %1, %cst {dimension_numbers = #tpu.dot_dimension_numbers<[1], [0], [0], [1], [0, 0, 1, 1], [], []>} : vector<128x8xbf16>, vector<8x128xbf16>, vector<128x128xf32> -> vector<128x128xf32>
    %3 = math.tanh %2 : vector<128x128xf32>
    %cst_3 = arith.constant 5.000000e-01 : f32
    %4 = vector.broadcast %cst_3 : f32 to vector<128x128xf32>
    %5 = arith.mulf %3, %4 : vector<128x128xf32>
    %cst_4 = arith.constant 5.000000e-01 : f32
    %6 = vector.broadcast %cst_4 : f32 to vector<128x128xf32>
    %7 = arith.addf %5, %6 : vector<128x128xf32>
    %8 = arith.truncf %7 : vector<128x128xf32> to vector<128x128xbf16>
    %c0_5 = arith.constant 0 : index
    %c0_6 = arith.constant 0 : index
    %9 = vector.load %arg3[%c0_5, %c0_6] : memref<4x128xbf16, #tpu.memory_space<vmem>>, vector<4x128xbf16>
    %cst_7 = arith.constant dense<0.000000e+00> : vector<4x128xf32>
    %10 = tpu.matmul %9, %8, %cst_7 {dimension_numbers = #tpu.dot_dimension_numbers<[1], [0], [0], [1], [0, 0, 1, 1], [], []>} : vector<4x128xbf16>, vector<128x128xbf16>, vector<4x128xf32> -> vector<4x128xf32>
    %11 = vector.extract_strided_slice %10 {offsets = [0, 0], sizes = [1, 128], strides = [1, 1]} : vector<4x128xf32> to vector<1x128xf32>
    %12 = vector.extract_strided_slice %10 {offsets = [1, 0], sizes = [1, 128], strides = [1, 1]} : vector<4x128xf32> to vector<1x128xf32>
    %13 = arith.maximumf %11, %12 : vector<1x128xf32>
    %14 = vector.extract_strided_slice %10 {offsets = [2, 0], sizes = [1, 128], strides = [1, 1]} : vector<4x128xf32> to vector<1x128xf32>
    %15 = arith.maximumf %13, %14 : vector<1x128xf32>
    %16 = vector.extract_strided_slice %10 {offsets = [3, 0], sizes = [1, 128], strides = [1, 1]} : vector<4x128xf32> to vector<1x128xf32>
    %17 = arith.maximumf %15, %16 : vector<1x128xf32>
    %18 = vector.broadcast %17 : vector<1x128xf32> to vector<4x128xf32>
    %19 = arith.subf %10, %18 : vector<4x128xf32>
    %20 = math.exp %19 : vector<4x128xf32>
    %21 = vector.extract_strided_slice %20 {offsets = [0, 0], sizes = [1, 128], strides = [1, 1]} : vector<4x128xf32> to vector<1x128xf32>
    %22 = vector.extract_strided_slice %20 {offsets = [1, 0], sizes = [1, 128], strides = [1, 1]} : vector<4x128xf32> to vector<1x128xf32>
    %23 = arith.addf %21, %22 : vector<1x128xf32>
    %24 = vector.extract_strided_slice %20 {offsets = [2, 0], sizes = [1, 128], strides = [1, 1]} : vector<4x128xf32> to vector<1x128xf32>
    %25 = arith.addf %23, %24 : vector<1x128xf32>
    %26 = vector.extract_strided_slice %20 {offsets = [3, 0], sizes = [1, 128], strides = [1, 1]} : vector<4x128xf32> to vector<1x128xf32>
    %27 = arith.addf %25, %26 : vector<1x128xf32>
    %28 = vector.broadcast %27 : vector<1x128xf32> to vector<4x128xf32>
    %29 = arith.divf %20, %28 : vector<4x128xf32>
    %c0_8 = arith.constant 0 : index
    %c0_9 = arith.constant 0 : index
    %30 = vector.load %arg4[%c0_8, %c0_9] : memref<4x128xf32, #tpu.memory_space<vmem>>, vector<4x128xf32>
    tpu.vector_store %arg4[%c0_8, %c0_9], %29 {strides = array<i32>} : memref<4x128xf32, #tpu.memory_space<vmem>>, vector<4x128xf32>,
    return
  }
  func.func @transform_0(%arg0: i32) -> (i32, i32) {
    %c0_i32 = arith.constant 0 : i32
    %c0_i32_0 = arith.constant 0 : i32
    return %c0_i32, %arg0 : i32, i32
  }
  func.func @transform_1(%arg0: i32) -> (i32, i32) {
    %c0_i32 = arith.constant 0 : i32
    %c0_i32_0 = arith.constant 0 : i32
    %c0_i32_1 = arith.constant 0 : i32
    return %c0_i32, %c0_i32_0 : i32, i32
  }
  func.func @transform_2(%arg0: i32) -> (i32, i32) {
    %c0_i32 = arith.constant 0 : i32
    %c0_i32_0 = arith.constant 0 : i32
    %c0_i32_1 = arith.constant 0 : i32
    return %c0_i32, %c0_i32_0 : i32, i32
  }
  func.func @transform_3(%arg0: i32) -> (i32, i32) {
    %c0_i32 = arith.constant 0 : i32
    %c0_i32_0 = arith.constant 0 : i32
    return %c0_i32, %arg0 : i32, i32
  }
}

</mosaic_0001>

<llo_original>
// kernel: mlp_forward_transposed.1
$region0: #{mlp_forward_transposed.1}
  #allocation0 [shape = 'u32[]', space=smem, size = 0x4, offset = 0x4, fixed_abs, tag = 'smem constant byte address 0x4 - core index']
  #allocation1 [shape = 'u32[144,128]{1,0:T(1,128)}', space=vmem, size = 0x12000, scoped, tag = 'internal scratch']
  %s0 = inlined_call_operand.vmem [shape: bf16[8,128], index: 0, kind: input, shape index: {}]
  %s1 = inlined_call_operand.vmem [shape: bf16[128,8], index: 1, kind: input, shape index: {}]
  %s2 = inlined_call_operand.vmem [shape: bf16[4,128], index: 2, kind: input, shape index: {}]
  %s3 = inlined_call_operand.hbm [shape: f32[4,128], index: 3, kind: output, shape index: {}]
  %s4 = sld [smem:[#allocation0]]
  $region22: #{mlp_forward_transposed.1} parent=0
    _
  %s6 = ssub.s32 1, %s4
  %s7 = scalar_select 0, %s6, %s4
  $region1: #{mlp_forward_transposed.1} parent=0
    #allocation2 [shape = 'u8[2048]{0}', space=vmem, size = 0x800, scoped, tag = 'output window, operand 0, single buffered']
    #allocation3 [shape = 's32[1]{0}', space=sflag, size = 0x4, scoped, tag = 'scoped memory for mlp_forward_transposed.1']
    %8 = vsyncpa [#allocation3], 0
    // Predicated region
    $region2: #{mlp_forward_transposed.1} parent=1 // pred_check
      _
    $region3: #{mlp_forward_transposed.1} parent=1 // pred_check_branch
      %10 = sbr.rel (0) target = $region5
    $region4: #{mlp_forward_transposed.1} parent=1 // pred_region
      _
    $region5: #{mlp_forward_transposed.1} parent=1 // pred_fallthru
      _
    // Predicated region
    $region6: #{mlp_forward_transposed.1} parent=1 // pred_check
      _
    $region7: #{mlp_forward_transposed.1} parent=1 // pred_check_branch
      %12 = sbr.rel (0) target = $region9
    $region8: #{mlp_forward_transposed.1} parent=1 // pred_region
      _
    $region9: #{mlp_forward_transposed.1} parent=1 // pred_fallthru
      _
    // Predicated region
    $region10: #{mlp_forward_transposed.1} parent=1 // pred_check
      _
    $region11: #{mlp_forward_transposed.1} parent=1 // pred_check_branch
      %14 = sbr.rel (0) target = $region13
    $region12: #{mlp_forward_transposed.1} parent=1 // pred_region
      _
    $region13: #{mlp_forward_transposed.1} parent=1 // pred_fallthru
      _
    %v16 = vld [vmem:[%s1] sm:$0xf]
    %v17 = vld [vmem:[%s1 + $0x4] sm:$0xf]
    %v18 = vld [vmem:[%s1 + $0x8] sm:$0xf]
    %v19 = vld [vmem:[%s1 + $0xc] sm:$0xf]
    %v20 = vld [vmem:[%s1 + $0x10] sm:$0xf]
    %v21 = vld [vmem:[%s1 + $0x14] sm:$0xf]
    %v22 = vld [vmem:[%s1 + $0x18] sm:$0xf]
    %v23 = vld [vmem:[%s1 + $0x1c] sm:$0xf]
    %v24 = vld [vmem:[%s1 + $0x20] sm:$0xf]
    %v25 = vld [vmem:[%s1 + $0x24] sm:$0xf]
    %v26 = vld [vmem:[%s1 + $0x28] sm:$0xf]
    %v27 = vld [vmem:[%s1 + $0x2c] sm:$0xf]
    %v28 = vld [vmem:[%s1 + $0x30] sm:$0xf]
    %v29 = vld [vmem:[%s1 + $0x34] sm:$0xf]
    %v30 = vld [vmem:[%s1 + $0x38] sm:$0xf]
    %v31 = vld [vmem:[%s1 + $0x3c] sm:$0xf]
    %v32 = vld [vmem:[%s0] sm:$0xf]
    %v49 = vunpack.c.l.b16 %v16
    %v50 = vunpack.c.l.b16 %v17
    %v51 = vunpack.c.l.b16 %v18
    %v52 = vunpack.c.l.b16 %v19
    %v53 = vunpack.c.l.b16 %v20
    %v54 = vunpack.c.l.b16 %v21
    %v55 = vunpack.c.l.b16 %v22
    %v56 = vunpack.c.l.b16 %v23
    %v57 = vunpack.c.l.b16 %v24
    %v58 = vunpack.c.l.b16 %v25
    %v59 = vunpack.c.l.b16 %v26
    %v60 = vunpack.c.l.b16 %v27
    %v61 = vunpack.c.l.b16 %v28
    %v62 = vunpack.c.l.b16 %v29
    %v63 = vunpack.c.l.b16 %v30
    %v64 = vunpack.c.l.b16 %v31
    %v65 = vpack.c.b16 %v50, %v49
    %v66 = vpack.c.b16 %v52, %v51
    %v67 = vpack.c.b16 %v54, %v53
    %v68 = vpack.c.b16 %v56, %v55
    %v69 = vpack.c.b16 %v58, %v57
    %v70 = vpack.c.b16 %v60, %v59
    %v71 = vpack.c.b16 %v62, %v61
    %v72 = vpack.c.b16 %v64, %v63
    %vm73 = vcmask 64512
    %v75 = vsel %vm73, %v65, 0
    %v78 = vsel %vm73, %v66, 0
    %v81 = vsel %vm73, %v67, 0
    %v84 = vsel %vm73, %v68, 0
    %v87 = vsel %vm73, %v69, 0
    %v90 = vsel %vm73, %v70, 0
    %v93 = vsel %vm73, %v71, 0
    %v96 = vsel %vm73, %v72, 0
    %vm98 = vcmask 1043456
    %v100 = vsel %vm98, %v32, 0
    %102 = vmatprep.subr.bf16.mxu0 0
    %103 = vmatpush1.bf16.msra.mxu0 %v100
    %104 = vmatprep.subr.bf16.mxu0 0
    %105 = vmatpush1.bf16.msra.mxu0 0
    %106 = vmatprep.subr.bf16.mxu0 0
    %107 = vmatpush1.bf16.msra.mxu0 0
    %108 = vmatprep.subr.bf16.mxu0 0
    %109 = vmatpush1.bf16.msra.mxu0 0
    %110 = vmatprep.subr.bf16.mxu0 0
    %111 = vmatpush1.bf16.msra.mxu0 0
    %112 = vmatprep.subr.bf16.mxu0 0
    %113 = vmatpush1.bf16.msra.mxu0 0
    %114 = vmatprep.subr.bf16.mxu0 0
    %115 = vmatpush1.bf16.msra.mxu0 0
    %116 = vmatprep.subr.bf16.mxu0 0
    %117 = vmatpush1.bf16.msra.mxu0 0
    %118 = vmatprep.subr.bf16.mxu0 0
    %119 = vmatpush1.bf16.msra.mxu0 0
    %120 = vmatprep.subr.bf16.mxu0 0
    %121 = vmatpush1.bf16.msra.mxu0 0
    %122 = vmatprep.subr.bf16.mxu0 0
    %123 = vmatpush1.bf16.msra.mxu0 0
    %124 = vmatprep.subr.bf16.mxu0 0
    %125 = vmatpush1.bf16.msra.mxu0 0
    %126 = vmatprep.subr.bf16.mxu0 0
    %127 = vmatpush1.bf16.msra.mxu0 0
    %128 = vmatprep.subr.bf16.mxu0 0
    %129 = vmatpush1.bf16.msra.mxu0 0
    %130 = vmatprep.subr.bf16.mxu0 0
    %131 = vmatpush1.bf16.msra.mxu0 0
    %132 = vmatprep.subr.bf16.mxu0 0
    %133 = vmatpush1.bf16.msra.mxu0 0
    %134 = vmatprep.mubr.bf16.mxu0 0
    %135 = vmatmul.mubr.bf16.gmra.mrb[0].mxu0 %v75
    %v136 = vpop.f32.mrb[0].mxu0
    %v137 = vadd.f32 0.0, %v136
    %v138 = vpop.f32.mrb[0].mxu0
    %v139 = vpop.f32.mrb[0].mxu0
    %v140 = vadd.f32 0.0, %v139
    %v141 = vpop.f32.mrb[0].mxu0
    %142 = vmatprep.mubr.bf16.mxu0 0
    %143 = vmatmul.mubr.bf16.gmra.mrb[0].mxu0 %v78
    %v144 = vpop.f32.mrb[0].mxu0
    %v145 = vadd.f32 0.0, %v144
    %v146 = vpop.f32.mrb[0].mxu0
    %v147 = vpop.f32.mrb[0].mxu0
    %v148 = vadd.f32 0.0, %v147
    %v149 = vpop.f32.mrb[0].mxu0
    %150 = vmatprep.mubr.bf16.mxu0 0
    %151 = vmatmul.mubr.bf16.gmra.mrb[0].mxu0 %v81
    %v152 = vpop.f32.mrb[0].mxu0
    %v153 = vadd.f32 0.0, %v152
    %v154 = vpop.f32.mrb[0].mxu0
    %v155 = vpop.f32.mrb[0].mxu0
    %v156 = vadd.f32 0.0, %v155
    %v157 = vpop.f32.mrb[0].mxu0
    %158 = vmatprep.mubr.bf16.mxu0 0
    %159 = vmatmul.mubr.bf16.gmra.mrb[0].mxu0 %v84
    %v160 = vpop.f32.mrb[0].mxu0
    %v161 = vadd.f32 0.0, %v160
    %v162 = vpop.f32.mrb[0].mxu0
    %v163 = vpop.f32.mrb[0].mxu0
    %v164 = vadd.f32 0.0, %v163
    %v165 = vpop.f32.mrb[0].mxu0
    %166 = vmatprep.mubr.bf16.mxu0 0
    %167 = vmatmul.mubr.bf16.gmra.mrb[0].mxu0 %v87
    %v168 = vpop.f32.mrb[0].mxu0
    %v169 = vadd.f32 0.0, %v168
    %v170 = vpop.f32.mrb[0].mxu0
    %v171 = vpop.f32.mrb[0].mxu0
    %v172 = vadd.f32 0.0, %v171
    %v173 = vpop.f32.mrb[0].mxu0
    %174 = vmatprep.mubr.bf16.mxu0 0
    %175 = vmatmul.mubr.bf16.gmra.mrb[0].mxu0 %v90
    %v176 = vpop.f32.mrb[0].mxu0
    %v177 = vadd.f32 0.0, %v176
    %v178 = vpop.f32.mrb[0].mxu0
    %v179 = vpop.f32.mrb[0].mxu0
    %v180 = vadd.f32 0.0, %v179
    %v181 = vpop.f32.mrb[0].mxu0
    %182 = vmatprep.mubr.bf16.mxu0 0
    %183 = vmatmul.mubr.bf16.gmra.mrb[0].mxu0 %v93
    %v184 = vpop.f32.mrb[0].mxu0
    %v185 = vadd.f32 0.0, %v184
    %v186 = vpop.f32.mrb[0].mxu0
    %v187 = vpop.f32.mrb[0].mxu0
    %v188 = vadd.f32 0.0, %v187
    %v189 = vpop.f32.mrb[0].mxu0
    %190 = vmatprep.mubr.bf16.mxu0 0
    %191 = vmatmul.mubr.bf16.gmra.mrb[0].mxu0 %v96
    %v192 = vpop.f32.mrb[0].mxu0
    %v193 = vadd.f32 0.0, %v192
    %v194 = vpop.f32.mrb[0].mxu0
    %v195 = vpop.f32.mrb[0].mxu0
    %v196 = vadd.f32 0.0, %v195
    %v197 = vpop.f32.mrb[0].mxu0
    %198 = vdwg.mxu0
    %v199 = vtanh.pop %v137
    %v200 = vtanh.pop %v140
    %v201 = vtanh.pop %v145
    %v202 = vtanh.pop %v148
    %v203 = vtanh.pop %v153
    %v204 = vtanh.pop %v156
    %v205 = vtanh.pop %v161
    %v206 = vtanh.pop %v164
    %v207 = vtanh.pop %v169
    %v208 = vtanh.pop %v172
    %v209 = vtanh.pop %v177
    %v210 = vtanh.pop %v180
    %v211 = vtanh.pop %v185
    %v212 = vtanh.pop %v188
    %v213 = vtanh.pop %v193
    %v214 = vtanh.pop %v196
    %v215 = vmul.f32 %v199, 0.5
    %v216 = vmul.f32 %v200, 0.5
    %v217 = vmul.f32 %v201, 0.5
    %v218 = vmul.f32 %v202, 0.5
    %v219 = vmul.f32 %v203, 0.5
    %v220 = vmul.f32 %v204, 0.5
    %v221 = vmul.f32 %v205, 0.5
    %v222 = vmul.f32 %v206, 0.5
    %v223 = vmul.f32 %v207, 0.5
    %v224 = vmul.f32 %v208, 0.5
    %v225 = vmul.f32 %v209, 0.5
    %v226 = vmul.f32 %v210, 0.5
    %v227 = vmul.f32 %v211, 0.5
    %v228 = vmul.f32 %v212, 0.5
    %v229 = vmul.f32 %v213, 0.5
    %v230 = vmul.f32 %v214, 0.5
    %v231 = vadd.f32 %v215, 0.5
    %v232 = vadd.f32 %v216, 0.5
    %v233 = vadd.f32 %v217, 0.5
    %v234 = vadd.f32 %v218, 0.5
    %v235 = vadd.f32 %v219, 0.5
    %v236 = vadd.f32 %v220, 0.5
    %v237 = vadd.f32 %v221, 0.5
    %v238 = vadd.f32 %v222, 0.5
    %v239 = vadd.f32 %v223, 0.5
    %v240 = vadd.f32 %v224, 0.5
    %v241 = vadd.f32 %v225, 0.5
    %v242 = vadd.f32 %v226, 0.5
    %v243 = vadd.f32 %v227, 0.5
    %v244 = vadd.f32 %v228, 0.5
    %v245 = vadd.f32 %v229, 0.5
    %v246 = vadd.f32 %v230, 0.5
    %v247 = vpack.c.bf16 %v232, %v231
    %v248 = vpack.c.bf16 %v234, %v233
    %v249 = vpack.c.bf16 %v236, %v235
    %v250 = vpack.c.bf16 %v238, %v237
    %v251 = vpack.c.bf16 %v240, %v239
    %v252 = vpack.c.bf16 %v242, %v241
    %v253 = vpack.c.bf16 %v244, %v243
    %v254 = vpack.c.bf16 %v246, %v245
    %v255 = vld [vmem:[%s2] sm:$0x3]
    %256 = vmatprep.subr.bf16.mxu0 0
    %257 = vmatpush1.bf16.msra.mxu0 %v247
    %258 = vmatprep.subr.bf16.mxu0 0
    %259 = vmatpush1.bf16.msra.mxu0 %v248
    %260 = vmatprep.subr.bf16.mxu0 0
    %261 = vmatpush1.bf16.msra.mxu0 %v249
    %262 = vmatprep.subr.bf16.mxu0 0
    %263 = vmatpush1.bf16.msra.mxu0 %v250
    %264 = vmatprep.subr.bf16.mxu0 0
    %265 = vmatpush1.bf16.msra.mxu0 %v251
    %266 = vmatprep.subr.bf16.mxu0 0
    %267 = vmatpush1.bf16.msra.mxu0 %v252
    %268 = vmatprep.subr.bf16.mxu0 0
    %269 = vmatpush1.bf16.msra.mxu0 %v253
    %270 = vmatprep.subr.bf16.mxu0 0
    %271 = vmatpush1.bf16.msra.mxu0 %v254
    %272 = vmatprep.subr.bf16.mxu0 0
    %273 = vmatpush1.bf16.msra.mxu0 0
    %274 = vmatprep.subr.bf16.mxu0 0
    %275 = vmatpush1.bf16.msra.mxu0 0
    %276 = vmatprep.subr.bf16.mxu0 0
    %277 = vmatpush1.bf16.msra.mxu0 0
    %278 = vmatprep.subr.bf16.mxu0 0
    %279 = vmatpush1.bf16.msra.mxu0 0
    %280 = vmatprep.subr.bf16.mxu0 0
    %281 = vmatpush1.bf16.msra.mxu0 0
    %282 = vmatprep.subr.bf16.mxu0 0
    %283 = vmatpush1.bf16.msra.mxu0 0
    %284 = vmatprep.subr.bf16.mxu0 0
    %285 = vmatpush1.bf16.msra.mxu0 0
    %286 = vmatprep.subr.bf16.mxu0 0
    %287 = vmatpush1.bf16.msra.mxu0 0
    %288 = vmatprep.mubr.bf16.mxu0 0
    %289 = vmatmul.mubr.bf16.gmra.mrb[0].mxu0 %v255
    %v290 = vpop.f32.mrb[0].mxu0
    %v291 = vadd.f32 0.0, %v290
    %v292 = vpop.f32.mrb[0].mxu0
    %v293 = vpop.f32.mrb[0].mxu0
    %v294 = vpop.f32.mrb[0].mxu0
    %295 = vdwg.mxu0
    %v297 = vrot.slane %v291, 1
    %v299 = vmax.f32 %v291, %v297
    %v300 = vrot.slane %v291, 2
    %v302 = vmax.f32 %v299, %v300
    %v303 = vrot.slane %v291, 3
    %v305 = vmax.f32 %v302, %v303
    %v306 = vlaneseq
    %v307 = vshrl.u32 %v306, 7
    %v308 = vsub.s32 0, %v307
    %v309 = vrot.slane %v305, %v308
    %v310 = vsub.f32 %v291, %v309
    %v311 = vmul.f32 %v310, 1.442695
    %v312 = vpow.pop %v311
    %v314 = vrot.slane %v312, 1
    %v316 = vadd.f32 %v312, %v314
    %v317 = vrot.slane %v312, 2
    %v319 = vadd.f32 %v316, %v317
    %v320 = vrot.slane %v312, 3
    %v322 = vadd.f32 %v319, %v320
    %v323 = vlaneseq
    %v324 = vshrl.u32 %v323, 7
    %v325 = vsub.s32 0, %v324
    %v326 = vrot.slane %v322, %v325
    %v327 = vrcp.pop %v326
    %v328 = vmul.f32 %v312, %v327
    %329 = vst [vmem:[#allocation2] sm:$0xf] %v328
    // Predicated region
    $region14: #{mlp_forward_transposed.1} parent=1 // pred_check
      _
    $region15: #{mlp_forward_transposed.1} parent=1 // pred_check_branch
      %331 = sbr.rel (0) target = $region17
    $region16: #{mlp_forward_transposed.1} parent=1 // pred_region
      %s333 = ssub.s32 64, 64
      %334 = vsyncadd [#allocation3], %s333
      %s336 = sshll.u32 [#allocation2], 4
      %s337 = int_to_ptr.vmem [resolvable:$true] %s336
      %339 = dma.vmem_to_hbm [thread:$0]  %s337, 64, %s3, [#allocation3]
    $region17: #{mlp_forward_transposed.1} parent=1 // pred_fallthru
      _
    // Predicated region
    $region18: #{mlp_forward_transposed.1} parent=1 // pred_check
      _
    $region19: #{mlp_forward_transposed.1} parent=1 // pred_check_branch
      %341 = sbr.rel (0) target = $region21
    $region20: #{mlp_forward_transposed.1} parent=1 // pred_region
      %342 = dma.done [#allocation3], 64
    $region21: #{mlp_forward_transposed.1} parent=1 // pred_fallthru
      _
    %343 = vsyncpa [#allocation3], 1

</llo_original>
